<compile_context>
chip_gen: v5e
topology: v5e:2x2
jax: 0.10.0
libtpu: 0.0.40
codegen_flags: <defaults>
</compile_context>

<pallas_src>
import functools

import jax
import jax.numpy as jnp
from jax.experimental import pallas as pl
from jax.experimental.pallas import tpu as pltpu

FEATURE_SIZE = 4
NEURE = 512
LN_EPS = 1e-5
DEFAULT_TILE_B = 1024  # safe on v5e/v6e/v7x (few MiB of VMEM per step)


def _round_up(n, m):
    return ((n + m - 1) // m) * m


def _grn_kernel(x_ref, w1_ref, b1_ref, wg_ref, bg_ref, o_ref):
    x = x_ref[...]                                   # (T, F) f32
    w1 = w1_ref[...]                                 # (F, NEURE) f32
    tb = x.shape[0]

    # fc[0]: Linear(F -> NEURE) as F broadcast multiply-adds on the VPU
    # (a K=4 MXU matmul would be ~3% utilized, pure latency), then ELU.
    h = jnp.broadcast_to(b1_ref[...], (tb, NEURE))
    for k in range(FEATURE_SIZE):
        h = h + x[:, k:k + 1] * w1[k:k + 1, :]
    # ELU(alpha=1): clamp before exp so the positive branch never sees inf.
    h = jnp.where(h > 0, h, jnp.exp(jnp.minimum(h, 0.0)) - 1.0)

    # fc[2] + gate1-linear + gate2 folded into ONE (NEURE, 2F) MXU matmul,
    # bf16 operands with f32 accumulation.
    g = jnp.dot(h.astype(jnp.bfloat16), wg_ref[...],
                preferred_element_type=jnp.float32) + bg_ref[...]
    z1 = g[:, :FEATURE_SIZE]                         # gate1 pre-sigmoid
    z2 = g[:, FEATURE_SIZE:]                         # gate2 (linear)
    gate = pl.reciprocal(1.0 + jnp.exp(-z1), approx=True)   # sigmoid (EUP)

    out = gate * z2 + x                              # gated output + residual

    # LayerNorm(feature_size): fresh module => weight=1, bias=0, eps=1e-5.
    mean = jnp.mean(out, axis=-1, keepdims=True)
    centered = out - mean
    var = jnp.mean(centered * centered, axis=-1, keepdims=True)
    o_ref[...] = (centered * jax.lax.rsqrt(var + LN_EPS)).astype(o_ref.dtype)


@functools.partial(jax.jit, static_argnames=("tile_b",))
def grn_metafeature(x, w1, b1, w2, b2, wg1, bg1, wg2, bg2, *, tile_b=DEFAULT_TILE_B):
    B, F = x.shape
    assert F == FEATURE_SIZE

    # Fold fc[2] into both gate linears (exact algebra):
    #   gate_k(y) = (h @ W2 + b2) @ Wgk + bgk = h @ (W2 @ Wgk) + (b2 @ Wgk + bgk)
    wg = jnp.concatenate([w2 @ wg1, w2 @ wg2], axis=1).astype(jnp.bfloat16)  # (NEURE, 2F)
    bg = jnp.concatenate([b2 @ wg1 + bg1, b2 @ wg2 + bg2], axis=1)           # (1, 2F)

    # Batch tiling: sublane-aligned tile, pad B so the grid divides evenly.
    tile_b = min(tile_b, _round_up(B, 8))
    b_pad = _round_up(B, tile_b)
    if b_pad != B:
        x = jnp.pad(x, ((0, b_pad - B), (0, 0)))
    grid = (b_pad // tile_b,)

    out = pl.pallas_call(
        _grn_kernel,
        out_shape=jax.ShapeDtypeStruct((b_pad, F), jnp.float32),
        grid=grid,
        in_specs=[
            pl.BlockSpec((tile_b, F), lambda i: (i, 0)),                 # x (streamed)
            pl.BlockSpec((FEATURE_SIZE, NEURE), lambda i: (0, 0)),       # W1 (resident)
            pl.BlockSpec((1, NEURE), lambda i: (0, 0)),                  # b1 (resident)
            pl.BlockSpec((NEURE, 2 * FEATURE_SIZE), lambda i: (0, 0)),   # fused gate W (bf16)
            pl.BlockSpec((1, 2 * FEATURE_SIZE), lambda i: (0, 0)),       # fused gate b
        ],
        out_specs=pl.BlockSpec((tile_b, F), lambda i: (i, 0)),
        compiler_params=pltpu.CompilerParams(
            dimension_semantics=("parallel",),   # megacore sharding on v7x
        ),
        cost_estimate=pl.CostEstimate(
            flops=2 * b_pad * NEURE * (FEATURE_SIZE + 2 * FEATURE_SIZE),
            transcendentals=b_pad * (NEURE + 2 * FEATURE_SIZE),
            bytes_accessed=(2 * b_pad * FEATURE_SIZE * 4
                            + FEATURE_SIZE * NEURE * 4 + NEURE * 4
                            + NEURE * 2 * FEATURE_SIZE * 2 + 2 * FEATURE_SIZE * 4),
        ),
    )(x, w1, b1, wg, bg)
    return out[:B]
    # TODO(synk): if this kernel ever dominates end-to-end time, switch to the
    # transposed layout (batch on lanes) so stores/elementwise are lane-dense.


def init_params(key):
    """PyTorch Linear default init: U(-1/sqrt(fan_in), 1/sqrt(fan_in)).
    Weights stored pre-transposed to (in, out); biases as (1, out)."""
    ks = jax.random.split(key, 8)

    def linear(kw, kb, fan_in, fan_out):
        bound = 1.0 / jnp.sqrt(jnp.float32(fan_in))
        w = jax.random.uniform(kw, (fan_in, fan_out), jnp.float32, -bound, bound)
        b = jax.random.uniform(kb, (1, fan_out), jnp.float32, -bound, bound)
        return w, b

    w1, b1 = linear(ks[0], ks[1], FEATURE_SIZE, NEURE)           # fc[0]
    w2, b2 = linear(ks[2], ks[3], NEURE, FEATURE_SIZE)           # fc[2]
    wg1, bg1 = linear(ks[4], ks[5], FEATURE_SIZE, FEATURE_SIZE)  # gate1[0]
    wg2, bg2 = linear(ks[6], ks[7], FEATURE_SIZE, FEATURE_SIZE)  # gate2
    return w1, b1, w2, b2, wg1, bg1, wg2, bg2


def _reference(x, w1, b1, w2, b2, wg1, bg1, wg2, bg2):
    h = x @ w1 + b1
    h = jnp.where(h > 0, h, jnp.exp(jnp.minimum(h, 0.0)) - 1.0)
    y = h @ w2 + b2
    g = jax.nn.sigmoid(y @ wg1 + bg1) * (y @ wg2 + bg2)
    out = g + x
    mean = jnp.mean(out, axis=-1, keepdims=True)
    var = jnp.mean((out - mean) ** 2, axis=-1, keepdims=True)
    return (out - mean) / jnp.sqrt(var + LN_EPS)


if __name__ == "__main__":
    key = jax.random.PRNGKey(0)
    k_x1, k_x2, k_p = jax.random.split(key, 3)
    params = init_params(k_p)

    # Case 1: multi-step grid (batch 24 with tile_b=8 -> 3 grid iterations).
    x1 = jax.random.normal(k_x1, (24, FEATURE_SIZE), jnp.float32)
    out1 = jax.block_until_ready(grn_metafeature(x1, *params, tile_b=8))
    ref1 = _reference(x1, *params)
    assert out1.shape == x1.shape
    # bf16 MXU operands + approx sigmoid reciprocal -> relax tolerance vs f32 ref.
    assert jnp.allclose(out1, ref1, atol=1e-2, rtol=1e-2), "mismatch (tiled case)"

    # Case 2: ragged batch exercising the pad/slice path (10 rows -> pad to 16).
    x2 = jax.random.normal(k_x2, (10, FEATURE_SIZE), jnp.float32)
    out2 = jax.block_until_ready(grn_metafeature(x2, *params))
    ref2 = _reference(x2, *params)
    assert out2.shape == x2.shape
    assert jnp.allclose(out2, ref2, atol=1e-2, rtol=1e-2), "mismatch (padded case)"

    print("KERNEL_OK")
</pallas_src>

<mosaic_0001>
module attributes {stable_mosaic.version = 11 : i64} {
  func.func @_grn_kernel(%arg0: i32, %arg1: memref<8x4xf32, #tpu.memory_space<vmem>>, %arg2: memref<4x512xf32, #tpu.memory_space<vmem>>, %arg3: memref<1x512xf32, #tpu.memory_space<vmem>>, %arg4: memref<512x8xbf16, #tpu.memory_space<vmem>>, %arg5: memref<1x8xf32, #tpu.memory_space<vmem>>, %arg6: memref<8x4xf32, #tpu.memory_space<vmem>>) attributes {dimension_semantics = [#tpu.dimension_semantics<parallel>], iteration_bounds = array<i64: 3>, scalar_prefetch = 0 : i64, scratch_operands = 0 : i64, tpu.core_type = #tpu.core_type<tc>, window_params = [{transform_indices = @transform_0, window_bounds = array<i64: 8, 4>}, {pipeline_mode = #tpu.pipeline_mode<synchronous>, transform_indices = @transform_1, window_bounds = array<i64: 4, 512>}, {pipeline_mode = #tpu.pipeline_mode<synchronous>, transform_indices = @transform_2, window_bounds = array<i64: 1, 512>}, {pipeline_mode = #tpu.pipeline_mode<synchronous>, transform_indices = @transform_3, window_bounds = array<i64: 512, 8>}, {pipeline_mode = #tpu.pipeline_mode<synchronous>, transform_indices = @transform_4, window_bounds = array<i64: 1, 8>}, {transform_indices = @transform_5, window_bounds = array<i64: 8, 4>}]} {
    %c0 = arith.constant 0 : index
    %c0_0 = arith.constant 0 : index
    %0 = vector.load %arg1[%c0, %c0_0] : memref<8x4xf32, #tpu.memory_space<vmem>>, vector<8x4xf32>
    %c0_1 = arith.constant 0 : index
    %c0_2 = arith.constant 0 : index
    %1 = vector.load %arg2[%c0_1, %c0_2] : memref<4x512xf32, #tpu.memory_space<vmem>>, vector<4x512xf32>
    %c0_3 = arith.constant 0 : index
    %c0_4 = arith.constant 0 : index
    %2 = vector.load %arg3[%c0_3, %c0_4] : memref<1x512xf32, #tpu.memory_space<vmem>>, vector<1x512xf32>
    %3 = vector.shape_cast %2 : vector<1x512xf32> to vector<1x512xf32>
    %4 = vector.broadcast %3 : vector<1x512xf32> to vector<8x512xf32>
    %5 = vector.extract_strided_slice %0 {offsets = [0, 0], sizes = [8, 1], strides = [1, 1]} : vector<8x4xf32> to vector<8x1xf32>
    %6 = vector.extract_strided_slice %1 {offsets = [0, 0], sizes = [1, 512], strides = [1, 1]} : vector<4x512xf32> to vector<1x512xf32>
    %7 = vector.broadcast %5 : vector<8x1xf32> to vector<8x512xf32>
    %8 = vector.broadcast %6 : vector<1x512xf32> to vector<8x512xf32>
    %9 = arith.mulf %7, %8 : vector<8x512xf32>
    %10 = arith.addf %4, %9 : vector<8x512xf32>
    %11 = vector.extract_strided_slice %0 {offsets = [0, 1], sizes = [8, 1], strides = [1, 1]} : vector<8x4xf32> to vector<8x1xf32>
    %12 = vector.extract_strided_slice %1 {offsets = [1, 0], sizes = [1, 512], strides = [1, 1]} : vector<4x512xf32> to vector<1x512xf32>
    %13 = vector.broadcast %11 : vector<8x1xf32> to vector<8x512xf32>
    %14 = vector.broadcast %12 : vector<1x512xf32> to vector<8x512xf32>
    %15 = arith.mulf %13, %14 : vector<8x512xf32>
    %16 = arith.addf %10, %15 : vector<8x512xf32>
    %17 = vector.extract_strided_slice %0 {offsets = [0, 2], sizes = [8, 1], strides = [1, 1]} : vector<8x4xf32> to vector<8x1xf32>
    %18 = vector.extract_strided_slice %1 {offsets = [2, 0], sizes = [1, 512], strides = [1, 1]} : vector<4x512xf32> to vector<1x512xf32>
    %19 = vector.broadcast %17 : vector<8x1xf32> to vector<8x512xf32>
    %20 = vector.broadcast %18 : vector<1x512xf32> to vector<8x512xf32>
    %21 = arith.mulf %19, %20 : vector<8x512xf32>
    %22 = arith.addf %16, %21 : vector<8x512xf32>
    %23 = vector.extract_strided_slice %0 {offsets = [0, 3], sizes = [8, 1], strides = [1, 1]} : vector<8x4xf32> to vector<8x1xf32>
    %24 = vector.extract_strided_slice %1 {offsets = [3, 0], sizes = [1, 512], strides = [1, 1]} : vector<4x512xf32> to vector<1x512xf32>
    %25 = vector.broadcast %23 : vector<8x1xf32> to vector<8x512xf32>
    %26 = vector.broadcast %24 : vector<1x512xf32> to vector<8x512xf32>
    %27 = arith.mulf %25, %26 : vector<8x512xf32>
    %28 = arith.addf %22, %27 : vector<8x512xf32>
    %cst = arith.constant 0.000000e+00 : f32
    %29 = vector.broadcast %cst : f32 to vector<8x512xf32>
    %30 = arith.cmpf ogt, %28, %29 : vector<8x512xf32>
    %cst_5 = arith.constant 0.000000e+00 : f32
    %31 = vector.broadcast %cst_5 : f32 to vector<8x512xf32>
    %32 = arith.minimumf %28, %31 : vector<8x512xf32>
    %33 = math.exp %32 : vector<8x512xf32>
    %cst_6 = arith.constant 1.000000e+00 : f32
    %34 = vector.broadcast %cst_6 : f32 to vector<8x512xf32>
    %35 = arith.subf %33, %34 : vector<8x512xf32>
    %36 = arith.select %30, %28, %35 : vector<8x512xi1>, vector<8x512xf32>
    %37 = arith.truncf %36 : vector<8x512xf32> to vector<8x512xbf16>
    %c0_7 = arith.constant 0 : index
    %c0_8 = arith.constant 0 : index
    %38 = vector.load %arg4[%c0_7, %c0_8] : memref<512x8xbf16, #tpu.memory_space<vmem>>, vector<512x8xbf16>
    %cst_9 = arith.constant dense<0.000000e+00> : vector<8x8xf32>
    %39 = tpu.matmul %37, %38, %cst_9 {dimension_numbers = #tpu.dot_dimension_numbers<[1], [0], [0], [1], [0, 0, 1, 1], [], []>} : vector<8x512xbf16>, vector<512x8xbf16>, vector<8x8xf32> -> vector<8x8xf32>
    %c0_10 = arith.constant 0 : index
    %c0_11 = arith.constant 0 : index
    %40 = vector.load %arg5[%c0_10, %c0_11] : memref<1x8xf32, #tpu.memory_space<vmem>>, vector<1x8xf32>
    %41 = vector.broadcast %40 : vector<1x8xf32> to vector<8x8xf32>
    %42 = arith.addf %39, %41 : vector<8x8xf32>
    %43 = vector.extract_strided_slice %42 {offsets = [0, 0], sizes = [8, 4], strides = [1, 1]} : vector<8x8xf32> to vector<8x4xf32>
    %44 = vector.extract_strided_slice %42 {offsets = [0, 4], sizes = [8, 4], strides = [1, 1]} : vector<8x8xf32> to vector<8x4xf32>
    %cst_12 = arith.constant 0.000000e+00 : f32
    %45 = vector.broadcast %cst_12 : f32 to vector<8x4xf32>
    %46 = arith.subf %45, %43 : vector<8x4xf32>
    %47 = math.exp %46 : vector<8x4xf32>
    %cst_13 = arith.constant 1.000000e+00 : f32
    %48 = vector.broadcast %cst_13 : f32 to vector<8x4xf32>
    %49 = arith.addf %48, %47 : vector<8x4xf32>
    %50 = tpu.reciprocal %49 {approx = true} : vector<8x4xf32> -> vector<8x4xf32>
    %51 = arith.mulf %50, %44 : vector<8x4xf32>
    %52 = arith.addf %51, %0 : vector<8x4xf32>
    %cst_14 = arith.constant dense<0.000000e+00> : vector<8xf32>
    %53 = vector.multi_reduction <add>, %52, %cst_14 [1] : vector<8x4xf32> to vector<8xf32>
    %54 = vector.shape_cast %53 : vector<8xf32> to vector<8x1xf32>
    %cst_15 = arith.constant 4.000000e+00 : f32
    %55 = vector.broadcast %cst_15 : f32 to vector<8x1xf32>
    %56 = arith.divf %54, %55 : vector<8x1xf32>
    %57 = vector.broadcast %56 : vector<8x1xf32> to vector<8x4xf32>
    %58 = arith.subf %52, %57 : vector<8x4xf32>
    %59 = arith.mulf %58, %58 : vector<8x4xf32>
    %cst_16 = arith.constant dense<0.000000e+00> : vector<8xf32>
    %60 = vector.multi_reduction <add>, %59, %cst_16 [1] : vector<8x4xf32> to vector<8xf32>
    %61 = vector.shape_cast %60 : vector<8xf32> to vector<8x1xf32>
    %cst_17 = arith.constant 4.000000e+00 : f32
    %62 = vector.broadcast %cst_17 : f32 to vector<8x1xf32>
    %63 = arith.divf %61, %62 : vector<8x1xf32>
    %cst_18 = arith.constant 9.99999974E-6 : f32
    %64 = vector.broadcast %cst_18 : f32 to vector<8x1xf32>
    %65 = arith.addf %63, %64 : vector<8x1xf32>
    %66 = math.rsqrt %65 : vector<8x1xf32>
    %67 = vector.broadcast %66 : vector<8x1xf32> to vector<8x4xf32>
    %68 = arith.mulf %58, %67 : vector<8x4xf32>
    %c0_19 = arith.constant 0 : index
    %c0_20 = arith.constant 0 : index
    %69 = vector.load %arg6[%c0_19, %c0_20] : memref<8x4xf32, #tpu.memory_space<vmem>>, vector<8x4xf32>
    tpu.vector_store %arg6[%c0_19, %c0_20], %68 {strides = array<i32>} : memref<8x4xf32, #tpu.memory_space<vmem>>, vector<8x4xf32>,
    return
  }
  func.func @transform_0(%arg0: i32) -> (i32, i32) {
    %c0_i32 = arith.constant 0 : i32
    %c0_i32_0 = arith.constant 0 : i32
    return %arg0, %c0_i32 : i32, i32
  }
  func.func @transform_1(%arg0: i32) -> (i32, i32) {
    %c0_i32 = arith.constant 0 : i32
    %c0_i32_0 = arith.constant 0 : i32
    %c0_i32_1 = arith.constant 0 : i32
    return %c0_i32, %c0_i32_0 : i32, i32
  }
  func.func @transform_2(%arg0: i32) -> (i32, i32) {
    %c0_i32 = arith.constant 0 : i32
    %c0_i32_0 = arith.constant 0 : i32
    %c0_i32_1 = arith.constant 0 : i32
    return %c0_i32, %c0_i32_0 : i32, i32
  }
  func.func @transform_3(%arg0: i32) -> (i32, i32) {
    %c0_i32 = arith.constant 0 : i32
    %c0_i32_0 = arith.constant 0 : i32
    %c0_i32_1 = arith.constant 0 : i32
    return %c0_i32, %c0_i32_0 : i32, i32
  }
  func.func @transform_4(%arg0: i32) -> (i32, i32) {
    %c0_i32 = arith.constant 0 : i32
    %c0_i32_0 = arith.constant 0 : i32
    %c0_i32_1 = arith.constant 0 : i32
    return %c0_i32, %c0_i32_0 : i32, i32
  }
  func.func @transform_5(%arg0: i32) -> (i32, i32) {
    %c0_i32 = arith.constant 0 : i32
    %c0_i32_0 = arith.constant 0 : i32
    return %arg0, %c0_i32 : i32, i32
  }
}

</mosaic_0001>

<llo_original>
// kernel: grn_metafeature.1
$region0: #{grn_metafeature.1}
  #allocation0 [shape = 'u32[]', space=smem, size = 0x4, offset = 0x4, fixed_abs, tag = 'smem constant byte address 0x4 - core index']
  #allocation1 [shape = 'u32[72,128]{1,0:T(1,128)}', space=vmem, size = 0x9000, scoped, tag = 'internal scratch']
  %s0 = inlined_call_operand.vmem [shape: f32[24,4], index: 0, kind: input, shape index: {}]
  %s1 = inlined_call_operand.vmem [shape: f32[4,512], index: 1, kind: input, shape index: {}]
  %s2 = inlined_call_operand.vmem [shape: f32[1,512], index: 2, kind: input, shape index: {}]
  %s3 = inlined_call_operand.vmem [shape: bf16[512,8], index: 3, kind: input, shape index: {}]
  %s4 = inlined_call_operand.vmem [shape: f32[1,8], index: 4, kind: input, shape index: {}]
  %s5 = inlined_call_operand.vmem [shape: f32[24,4], index: 5, kind: output, shape index: {}]
  %s6 = sld [smem:[#allocation0]]
  $region53: #{grn_metafeature.1} parent=0
    _
  %s8 = ssub.s32 1, %s6
  %s9 = scalar_select 0, %s8, %s6
  loop: start=0, step=1, limit=5
  $region2: #{grn_metafeature.1} parent=0 // loop_pre_header
    _
  $region3: #{grn_metafeature.1} parent=0 // loop_header
    %s11 = sphi 0, %s15
    %p12 = scmp.ge.s32.totalorder %s11, 5
    %s21 = sphi 0, %s23
    %s24 = sphi 0, %s21
    %s25 = sphi 0, %s24
    %s41 = sphi 0, %s25
    %s45 = sphi 0, %s45
    %s47 = sphi 0, %s45
    %s48 = sphi 0, %s47
    %s62 = sphi 0, %s48
    %s66 = sphi 0, %s66
    %s68 = sphi 0, %s66
    %s69 = sphi 0, %s68
    %s83 = sphi 0, %s69
    %s87 = sphi 0, %s87
    %s89 = sphi 0, %s87
    %s90 = sphi 0, %s89
    %s104 = sphi 0, %s90
    %s108 = sphi 0, %s108
    %s110 = sphi 0, %s108
    %s111 = sphi 0, %s110
    %s125 = sphi 0, %s111
    %s131 = sphi 0, %s133
    %s134 = sphi 0, %s131
    %s135 = sphi 0, %s134
    %s151 = sphi 0, %s135
  $region4: #{grn_metafeature.1} parent=0 // loop_header_branch
    %14 = sbr.rel (%p12) target = $region8
  $region5: #{grn_metafeature.1} parent=0 // loop_body
    %s16 = ssub.s32 %s11, 1
    %s17 = ssub.s32 %s11, 2
    %s18 = sadd.s32 %s11, 1
    %s19 = ssub.s32 %s11, %s18
    %p20 = scmp.eq.s32.totalorder %s19, 0
    %s22 = sadd.s32 %s21, 1
    %s23 = scalar_select %p20, %s21, %s22
    %p26 = pneg %p20
    %p27 = scmp.eq.s32.totalorder %s11, 2
    %p28 = por %p26, %p27
    %p29 = scmp.ne.s32.totalorder %s21, %s24
    %p30 = scmp.eq.s32.totalorder %s11, 0
    %p31 = por %p29, %p30
    %p32 = scmp.ne.s32.totalorder %s21, %s24
    %p33 = scmp.eq.s32.totalorder %s16, 2
    %p34 = por %p32, %p33
    %p35 = scmp.ne.s32.totalorder %s24, %s25
    %p36 = scmp.eq.s32.totalorder %s16, 0
    %p37 = por %p35, %p36
    %p38 = scmp.ne.s32.totalorder %s24, %s25
    %p39 = scmp.eq.s32.totalorder %s17, 2
    %p40 = por %p38, %p39
    %p42 = scmp.ne.s32.totalorder %s25, %s41
    %p43 = scmp.eq.s32.totalorder %s17, 0
    %p44 = por %p42, %p43
    %s46 = sadd.s32 %s45, 1
    %p49 = scmp.eq.s32.totalorder %s11, 2
    %p50 = scmp.ne.s32.totalorder %s45, %s47
    %p51 = scmp.eq.s32.totalorder %s11, 0
    %p52 = por %p50, %p51
    %p53 = scmp.ne.s32.totalorder %s45, %s47
    %p54 = scmp.eq.s32.totalorder %s16, 2
    %p55 = por %p53, %p54
    %p56 = scmp.ne.s32.totalorder %s47, %s48
    %p57 = scmp.eq.s32.totalorder %s16, 0
    %p58 = por %p56, %p57
    %p59 = scmp.ne.s32.totalorder %s47, %s48
    %p60 = scmp.eq.s32.totalorder %s17, 2
    %p61 = por %p59, %p60
    %p63 = scmp.ne.s32.totalorder %s48, %s62
    %p64 = scmp.eq.s32.totalorder %s17, 0
    %p65 = por %p63, %p64
    %s67 = sadd.s32 %s66, 1
    %p70 = scmp.eq.s32.totalorder %s11, 2
    %p71 = scmp.ne.s32.totalorder %s66, %s68
    %p72 = scmp.eq.s32.totalorder %s11, 0
    %p73 = por %p71, %p72
    %p74 = scmp.ne.s32.totalorder %s66, %s68
    %p75 = scmp.eq.s32.totalorder %s16, 2
    %p76 = por %p74, %p75
    %p77 = scmp.ne.s32.totalorder %s68, %s69
    %p78 = scmp.eq.s32.totalorder %s16, 0
    %p79 = por %p77, %p78
    %p80 = scmp.ne.s32.totalorder %s68, %s69
    %p81 = scmp.eq.s32.totalorder %s17, 2
    %p82 = por %p80, %p81
    %p84 = scmp.ne.s32.totalorder %s69, %s83
    %p85 = scmp.eq.s32.totalorder %s17, 0
    %p86 = por %p84, %p85
    %s88 = sadd.s32 %s87, 1
    %p91 = scmp.eq.s32.totalorder %s11, 2
    %p92 = scmp.ne.s32.totalorder %s87, %s89
    %p93 = scmp.eq.s32.totalorder %s11, 0
    %p94 = por %p92, %p93
    %p95 = scmp.ne.s32.totalorder %s87, %s89
    %p96 = scmp.eq.s32.totalorder %s16, 2
    %p97 = por %p95, %p96
    %p98 = scmp.ne.s32.totalorder %s89, %s90
    %p99 = scmp.eq.s32.totalorder %s16, 0
    %p100 = por %p98, %p99
    %p101 = scmp.ne.s32.totalorder %s89, %s90
    %p102 = scmp.eq.s32.totalorder %s17, 2
    %p103 = por %p101, %p102
    %p105 = scmp.ne.s32.totalorder %s90, %s104
    %p106 = scmp.eq.s32.totalorder %s17, 0
    %p107 = por %p105, %p106
    %s109 = sadd.s32 %s108, 1
    %p112 = scmp.eq.s32.totalorder %s11, 2
    %p113 = scmp.ne.s32.totalorder %s108, %s110
    %p114 = scmp.eq.s32.totalorder %s11, 0
    %p115 = por %p113, %p114
    %p116 = scmp.ne.s32.totalorder %s108, %s110
    %p117 = scmp.eq.s32.totalorder %s16, 2
    %p118 = por %p116, %p117
    %p119 = scmp.ne.s32.totalorder %s110, %s111
    %p120 = scmp.eq.s32.totalorder %s16, 0
    %p121 = por %p119, %p120
    %p122 = scmp.ne.s32.totalorder %s110, %s111
    %p123 = scmp.eq.s32.totalorder %s17, 2
    %p124 = por %p122, %p123
    %p126 = scmp.ne.s32.totalorder %s111, %s125
    %p127 = scmp.eq.s32.totalorder %s17, 0
    %p128 = por %p126, %p127
    %s129 = ssub.s32 %s11, %s18
    %p130 = scmp.eq.s32.totalorder %s129, 0
    %s132 = sadd.s32 %s131, 1
    %s133 = scalar_select %p130, %s131, %s132
    %p136 = pneg %p130
    %p137 = scmp.eq.s32.totalorder %s11, 2
    %p138 = por %p136, %p137
    %p139 = scmp.ne.s32.totalorder %s131, %s134
    %p140 = scmp.eq.s32.totalorder %s11, 0
    %p141 = por %p139, %p140
    %p142 = scmp.ne.s32.totalorder %s131, %s134
    %p143 = scmp.eq.s32.totalorder %s16, 2
    %p144 = por %p142, %p143
    %p145 = scmp.ne.s32.totalorder %s134, %s135
    %p146 = scmp.eq.s32.totalorder %s16, 0
    %p147 = por %p145, %p146
    %p148 = scmp.ne.s32.totalorder %s134, %s135
    %p149 = scmp.eq.s32.totalorder %s17, 2
    %p150 = por %p148, %p149
    %p152 = scmp.ne.s32.totalorder %s135, %s151
    %p153 = scmp.eq.s32.totalorder %s17, 0
    %p154 = por %p152, %p153
    %p155 = scmp.le.s32.totalorder 1, %s11
    %p156 = scmp.lt.s32.totalorder %s11, 4
    %p157 = pnand %p155, %p156
    %p158 = pneg %p157
    // Predicated region
    $region9: #{grn_metafeature.1} parent=5 // pred_check
      _
    $region10: #{grn_metafeature.1} parent=5 // pred_check_branch
      %160 = sbr.rel (%p157) target = $region12
    $region11: #{grn_metafeature.1} parent=5 // pred_region
      %s161 = ssub.s32 %s11, 1
      // Predicated region
      $region13: #{grn_metafeature.1} parent=11 // pred_check
        %p162 = pneg %p58
      $region14: #{grn_metafeature.1} parent=11 // pred_check_branch
        %164 = sbr.rel (%p162) target = $region16
      $region15: #{grn_metafeature.1} parent=11 // pred_region
        _
      $region16: #{grn_metafeature.1} parent=11 // pred_fallthru
        _
      // Predicated region
      $region17: #{grn_metafeature.1} parent=11 // pred_check
        %p165 = pneg %p79
      $region18: #{grn_metafeature.1} parent=11 // pred_check_branch
        %167 = sbr.rel (%p165) target = $region20
      $region19: #{grn_metafeature.1} parent=11 // pred_region
        _
      $region20: #{grn_metafeature.1} parent=11 // pred_fallthru
        _
      // Predicated region
      $region21: #{grn_metafeature.1} parent=11 // pred_check
        %p168 = pneg %p100
      $region22: #{grn_metafeature.1} parent=11 // pred_check_branch
        %170 = sbr.rel (%p168) target = $region24
      $region23: #{grn_metafeature.1} parent=11 // pred_region
        _
      $region24: #{grn_metafeature.1} parent=11 // pred_fallthru
        _
      // Predicated region
      $region25: #{grn_metafeature.1} parent=11 // pred_check
        %p171 = pneg %p121
      $region26: #{grn_metafeature.1} parent=11 // pred_check_branch
        %173 = sbr.rel (%p171) target = $region28
      $region27: #{grn_metafeature.1} parent=11 // pred_region
        _
      $region28: #{grn_metafeature.1} parent=11 // pred_fallthru
        _
    $region12: #{grn_metafeature.1} parent=5 // pred_fallthru
      _
    %p174 = scmp.lt.s32.totalorder %s11, 3
    // Predicated region
    $region29: #{grn_metafeature.1} parent=5 // pred_check
      %p175 = pneg %p174
    $region30: #{grn_metafeature.1} parent=5 // pred_check_branch
      %177 = sbr.rel (%p175) target = $region32
    $region31: #{grn_metafeature.1} parent=5 // pred_region
      // Predicated region
      $region33: #{grn_metafeature.1} parent=31 // pred_check
        %p178 = pneg %p31
      $region34: #{grn_metafeature.1} parent=31 // pred_check_branch
        %180 = sbr.rel (%p178) target = $region36
      $region35: #{grn_metafeature.1} parent=31 // pred_region
        %p181 = scmp.lt.s32.totalorder %s11, 2
        %s182 = scalar_select %p181, %s11, 2
        %s183 = smul.addr %s182, 8
        %s184 = scalar_lea.vmem %s0, %s183
      $region36: #{grn_metafeature.1} parent=31 // pred_fallthru
        _
    $region32: #{grn_metafeature.1} parent=5 // pred_fallthru
      _
    %p185 = scmp.le.s32.totalorder 1, %s11
    %p186 = scmp.lt.s32.totalorder %s11, 4
    %p187 = pnand %p185, %p186
    %p188 = pneg %p187
    // Predicated region
    $region37: #{grn_metafeature.1} parent=5 // pred_check
      _
    $region38: #{grn_metafeature.1} parent=5 // pred_check_branch
      %190 = sbr.rel (%p187) target = $region40
    $region39: #{grn_metafeature.1} parent=5 // pred_region
      %s191 = ssub.s32 %s11, 1
      %p192 = scmp.lt.s32.totalorder %s16, 2
      %s193 = scalar_select %p192, %s16, 2
      %s194 = smul.addr %s193, 8
      %s195 = scalar_lea.vmem %s0, %s194
      %p196 = pneg %p37
      %p197 = pneg %p34
      %p198 = pneg %p58
      %p199 = pneg %p55
      %p200 = pneg %p79
      %p201 = pneg %p76
      %p202 = pneg %p100
      %p203 = pneg %p97
      %p204 = pneg %p121
      %p205 = pneg %p118
      %p206 = pneg %p147
      %p207 = pneg %p144
      %p208 = scmp.lt.s32.totalorder %s16, 2
      %s209 = scalar_select %p208, %s16, 2
      %s210 = smul.addr %s209, 8
      %s211 = scalar_lea.vmem %s5, %s210
      %p212 = scmp.lt.s32.totalorder %s16, 2
      %s213 = scalar_select %p212, %s16, 2
      %s214 = smul.addr %s213, 8
      %s215 = scalar_lea.vmem %s0, %s214
      %p216 = scmp.lt.s32.totalorder %s16, 2
      %s217 = scalar_select %p216, %s16, 2
      %s218 = smul.addr %s217, 8
      %s219 = scalar_lea.vmem %s5, %s218
      %v220 = vld [vmem:[%s215] sm:$0xff]
      %v221 = vld [vmem:[%s1] sm:$0xff]
      %v222 = vld [vmem:[%s1 + $0x8] sm:$0xff]
      %v223 = vld [vmem:[%s2] sm:$0xf]
      %v225 = vperm.slane %v223, 0
      %v226 = vperm.slane %v223, 1
      %v227 = vperm.slane %v223, 2
      %v228 = vperm.slane %v223, 3
      %234 = vset.pattern.permute.xlu0 0
      %235 = vperm.xlu0 %234, %v220
      %v236 = vpop.permute.xlu0 %235
      %v240 = vperm.slane %v221, 0
      %v241 = vperm.slane %v221, 4
      %v242 = vperm.slane %v222, 0
      %v243 = vperm.slane %v222, 4
      %v248 = vperm.slane %v240, 0
      %v249 = vperm.slane %v241, 0
      %v250 = vperm.slane %v242, 0
      %v251 = vperm.slane %v243, 0
      %v252 = vmul.f32 %v236, %v248
      %v253 = vmul.f32 %v236, %v249
      %v254 = vmul.f32 %v236, %v250
      %v255 = vmul.f32 %v236, %v251
      %v256 = vadd.f32 %v225, %v252
      %v257 = vadd.f32 %v226, %v253
      %v258 = vadd.f32 %v227, %v254
      %v259 = vadd.f32 %v228, %v255
      %260 = vset.pattern.permute.xlu0 1
      %261 = vperm.xlu0 %260, %v220
      %v262 = vpop.permute.xlu0 %261
      %v264 = vperm.slane %v221, 1
      %v265 = vperm.slane %v221, 5
      %v266 = vperm.slane %v222, 1
      %v267 = vperm.slane %v222, 5
      %v272 = vperm.slane %v264, 1
      %v273 = vperm.slane %v265, 1
      %v274 = vperm.slane %v266, 1
      %v275 = vperm.slane %v267, 1
      %v276 = vmul.f32 %v262, %v272
      %v277 = vmul.f32 %v262, %v273
      %v278 = vmul.f32 %v262, %v274
      %v279 = vmul.f32 %v262, %v275
      %v280 = vadd.f32 %v256, %v276
      %v281 = vadd.f32 %v257, %v277
      %v282 = vadd.f32 %v258, %v278
      %v283 = vadd.f32 %v259, %v279
      %284 = vset.pattern.permute.xlu0 2
      %285 = vperm.xlu0 %284, %v220
      %v286 = vpop.permute.xlu0 %285
      %v288 = vperm.slane %v221, 2
      %v289 = vperm.slane %v221, 6
      %v290 = vperm.slane %v222, 2
      %v291 = vperm.slane %v222, 6
      %v296 = vperm.slane %v288, 2
      %v297 = vperm.slane %v289, 2
      %v298 = vperm.slane %v290, 2
      %v299 = vperm.slane %v291, 2
      %v300 = vmul.f32 %v286, %v296
      %v301 = vmul.f32 %v286, %v297
      %v302 = vmul.f32 %v286, %v298
      %v303 = vmul.f32 %v286, %v299
      %v304 = vadd.f32 %v280, %v300
      %v305 = vadd.f32 %v281, %v301
      %v306 = vadd.f32 %v282, %v302
      %v307 = vadd.f32 %v283, %v303
      %308 = vset.pattern.permute.xlu0 3
      %309 = vperm.xlu0 %308, %v220
      %v310 = vpop.permute.xlu0 %309
      %v312 = vperm.slane %v221, 3
      %v313 = vperm.slane %v221, 7
      %v314 = vperm.slane %v222, 3
      %v315 = vperm.slane %v222, 7
      %v320 = vperm.slane %v312, 3
      %v321 = vperm.slane %v313, 3
      %v322 = vperm.slane %v314, 3
      %v323 = vperm.slane %v315, 3
      %v324 = vmul.f32 %v310, %v320
      %v325 = vmul.f32 %v310, %v321
      %v326 = vmul.f32 %v310, %v322
      %v327 = vmul.f32 %v310, %v323
      %v328 = vadd.f32 %v304, %v324
      %v329 = vadd.f32 %v305, %v325
      %v330 = vadd.f32 %v306, %v326
      %v331 = vadd.f32 %v307, %v327
      %vm332 = vcmp.gt.f32.partialorder %v328, 0.0
      %vm333 = vcmp.gt.f32.partialorder %v329, 0.0
      %vm334 = vcmp.gt.f32.partialorder %v330, 0.0
      %vm335 = vcmp.gt.f32.partialorder %v331, 0.0
      %v336 = vmin.f32 %v328, 0.0
      %v337 = vmin.f32 %v329, 0.0
      %v338 = vmin.f32 %v330, 0.0
      %v339 = vmin.f32 %v331, 0.0
      %v340 = vmul.f32 %v336, 1.442695
      %v341 = vpow.pop %v340
      %v342 = vmul.f32 %v337, 1.442695
      %v343 = vpow.pop %v342
      %v344 = vmul.f32 %v338, 1.442695
      %v345 = vpow.pop %v344
      %v346 = vmul.f32 %v339, 1.442695
      %v347 = vpow.pop %v346
      %v348 = vsub.f32 %v341, 1.0
      %v349 = vsub.f32 %v343, 1.0
      %v350 = vsub.f32 %v345, 1.0
      %v351 = vsub.f32 %v347, 1.0
      %v352 = vsel %vm332, %v328, %v348
      %v353 = vsel %vm333, %v329, %v349
      %v354 = vsel %vm334, %v330, %v350
      %v355 = vsel %vm335, %v331, %v351
      %v356 = vpack.c.bf16 %v352, %v352
      %v357 = vpack.c.bf16 %v353, %v353
      %v358 = vpack.c.bf16 %v354, %v354
      %v359 = vpack.c.bf16 %v355, %v355
      %v360 = vld [vmem:[%s3] sm:$0xf]
      %v361 = vld [vmem:[%s3 + $0x4] sm:$0xf]
      %v362 = vld [vmem:[%s3 + $0x8] sm:$0xf]
      %v363 = vld [vmem:[%s3 + $0xc] sm:$0xf]
      %v364 = vld [vmem:[%s3 + $0x10] sm:$0xf]
      %v365 = vld [vmem:[%s3 + $0x14] sm:$0xf]
      %v366 = vld [vmem:[%s3 + $0x18] sm:$0xf]
      %v367 = vld [vmem:[%s3 + $0x1c] sm:$0xf]
      %v368 = vld [vmem:[%s3 + $0x20] sm:$0xf]
      %v369 = vld [vmem:[%s3 + $0x24] sm:$0xf]
      %v370 = vld [vmem:[%s3 + $0x28] sm:$0xf]
      %v371 = vld [vmem:[%s3 + $0x2c] sm:$0xf]
      %v372 = vld [vmem:[%s3 + $0x30] sm:$0xf]
      %v373 = vld [vmem:[%s3 + $0x34] sm:$0xf]
      %v374 = vld [vmem:[%s3 + $0x38] sm:$0xf]
      %v375 = vld [vmem:[%s3 + $0x3c] sm:$0xf]
      %v376 = vld [vmem:[%s3 + $0x40] sm:$0xf]
      %v377 = vld [vmem:[%s3 + $0x44] sm:$0xf]
      %v378 = vld [vmem:[%s3 + $0x48] sm:$0xf]
      %v379 = vld [vmem:[%s3 + $0x4c] sm:$0xf]
      %v380 = vld [vmem:[%s3 + $0x50] sm:$0xf]
      %v381 = vld [vmem:[%s3 + $0x54] sm:$0xf]
      %v382 = vld [vmem:[%s3 + $0x58] sm:$0xf]
      %v383 = vld [vmem:[%s3 + $0x5c] sm:$0xf]
      %v384 = vld [vmem:[%s3 + $0x60] sm:$0xf]
      %v385 = vld [vmem:[%s3 + $0x64] sm:$0xf]
      %v386 = vld [vmem:[%s3 + $0x68] sm:$0xf]
      %v387 = vld [vmem:[%s3 + $0x6c] sm:$0xf]
      %v388 = vld [vmem:[%s3 + $0x70] sm:$0xf]
      %v389 = vld [vmem:[%s3 + $0x74] sm:$0xf]
      %v390 = vld [vmem:[%s3 + $0x78] sm:$0xf]
      %v391 = vld [vmem:[%s3 + $0x7c] sm:$0xf]
      %v392 = vld [vmem:[%s3 + $0x80] sm:$0xf]
      %v393 = vld [vmem:[%s3 + $0x84] sm:$0xf]
      %v394 = vld [vmem:[%s3 + $0x88] sm:$0xf]
      %v395 = vld [vmem:[%s3 + $0x8c] sm:$0xf]
      %v396 = vld [vmem:[%s3 + $0x90] sm:$0xf]
      %v397 = vld [vmem:[%s3 + $0x94] sm:$0xf]
      %v398 = vld [vmem:[%s3 + $0x98] sm:$0xf]
      %v399 = vld [vmem:[%s3 + $0x9c] sm:$0xf]
      %v400 = vld [vmem:[%s3 + $0xa0] sm:$0xf]
      %v401 = vld [vmem:[%s3 + $0xa4] sm:$0xf]
      %v402 = vld [vmem:[%s3 + $0xa8] sm:$0xf]
      %v403 = vld [vmem:[%s3 + $0xac] sm:$0xf]
      %v404 = vld [vmem:[%s3 + $0xb0] sm:$0xf]
      %v405 = vld [vmem:[%s3 + $0xb4] sm:$0xf]
      %v406 = vld [vmem:[%s3 + $0xb8] sm:$0xf]
      %v407 = vld [vmem:[%s3 + $0xbc] sm:$0xf]
      %v408 = vld [vmem:[%s3 + $0xc0] sm:$0xf]
      %v409 = vld [vmem:[%s3 + $0xc4] sm:$0xf]
      %v410 = vld [vmem:[%s3 + $0xc8] sm:$0xf]
      %v411 = vld [vmem:[%s3 + $0xcc] sm:$0xf]
      %v412 = vld [vmem:[%s3 + $0xd0] sm:$0xf]
      %v413 = vld [vmem:[%s3 + $0xd4] sm:$0xf]
      %v414 = vld [vmem:[%s3 + $0xd8] sm:$0xf]
      %v415 = vld [vmem:[%s3 + $0xdc] sm:$0xf]
      %v416 = vld [vmem:[%s3 + $0xe0] sm:$0xf]
      %v417 = vld [vmem:[%s3 + $0xe4] sm:$0xf]
      %v418 = vld [vmem:[%s3 + $0xe8] sm:$0xf]
      %v419 = vld [vmem:[%s3 + $0xec] sm:$0xf]
      %v420 = vld [vmem:[%s3 + $0xf0] sm:$0xf]
      %v421 = vld [vmem:[%s3 + $0xf4] sm:$0xf]
      %v422 = vld [vmem:[%s3 + $0xf8] sm:$0xf]
      %v423 = vld [vmem:[%s3 + $0xfc] sm:$0xf]
      %v424 = vld [vmem:[%s4] sm:$0x1]
      %v426 = vperm.slane %v424, 0
      %v492 = vunpack.c.l.b16 %v360
      %v493 = vunpack.c.l.b16 %v361
      %v494 = vunpack.c.l.b16 %v362
      %v495 = vunpack.c.l.b16 %v363
      %v496 = vunpack.c.l.b16 %v364
      %v497 = vunpack.c.l.b16 %v365
      %v498 = vunpack.c.l.b16 %v366
      %v499 = vunpack.c.l.b16 %v367
      %v500 = vunpack.c.l.b16 %v368
      %v501 = vunpack.c.l.b16 %v369
      %v502 = vunpack.c.l.b16 %v370
      %v503 = vunpack.c.l.b16 %v371
      %v504 = vunpack.c.l.b16 %v372
      %v505 = vunpack.c.l.b16 %v373
      %v506 = vunpack.c.l.b16 %v374
      %v507 = vunpack.c.l.b16 %v375
      %v508 = vunpack.c.l.b16 %v376
      %v509 = vunpack.c.l.b16 %v377
      %v510 = vunpack.c.l.b16 %v378
      %v511 = vunpack.c.l.b16 %v379
      %v512 = vunpack.c.l.b16 %v380
      %v513 = vunpack.c.l.b16 %v381
      %v514 = vunpack.c.l.b16 %v382
      %v515 = vunpack.c.l.b16 %v383
      %v516 = vunpack.c.l.b16 %v384
      %v517 = vunpack.c.l.b16 %v385
      %v518 = vunpack.c.l.b16 %v386
      %v519 = vunpack.c.l.b16 %v387
      %v520 = vunpack.c.l.b16 %v388
      %v521 = vunpack.c.l.b16 %v389
      %v522 = vunpack.c.l.b16 %v390
      %v523 = vunpack.c.l.b16 %v391
      %v524 = vunpack.c.l.b16 %v392
      %v525 = vunpack.c.l.b16 %v393
      %v526 = vunpack.c.l.b16 %v394
      %v527 = vunpack.c.l.b16 %v395
      %v528 = vunpack.c.l.b16 %v396
      %v529 = vunpack.c.l.b16 %v397
      %v530 = vunpack.c.l.b16 %v398
      %v531 = vunpack.c.l.b16 %v399
      %v532 = vunpack.c.l.b16 %v400
      %v533 = vunpack.c.l.b16 %v401
      %v534 = vunpack.c.l.b16 %v402
      %v535 = vunpack.c.l.b16 %v403
      %v536 = vunpack.c.l.b16 %v404
      %v537 = vunpack.c.l.b16 %v405
      %v538 = vunpack.c.l.b16 %v406
      %v539 = vunpack.c.l.b16 %v407
      %v540 = vunpack.c.l.b16 %v408
      %v541 = vunpack.c.l.b16 %v409
      %v542 = vunpack.c.l.b16 %v410
      %v543 = vunpack.c.l.b16 %v411
      %v544 = vunpack.c.l.b16 %v412
      %v545 = vunpack.c.l.b16 %v413
      %v546 = vunpack.c.l.b16 %v414
      %v547 = vunpack.c.l.b16 %v415
      %v548 = vunpack.c.l.b16 %v416
      %v549 = vunpack.c.l.b16 %v417
      %v550 = vunpack.c.l.b16 %v418
      %v551 = vunpack.c.l.b16 %v419
      %v552 = vunpack.c.l.b16 %v420
      %v553 = vunpack.c.l.b16 %v421
      %v554 = vunpack.c.l.b16 %v422
      %v555 = vunpack.c.l.b16 %v423
      %v556 = vpack.c.b16 %v493, %v492
      %v557 = vpack.c.b16 %v495, %v494
      %v558 = vpack.c.b16 %v497, %v496
      %v559 = vpack.c.b16 %v499, %v498
      %v560 = vpack.c.b16 %v501, %v500
      %v561 = vpack.c.b16 %v503, %v502
      %v562 = vpack.c.b16 %v505, %v504
      %v563 = vpack.c.b16 %v507, %v506
      %v564 = vpack.c.b16 %v509, %v508
      %v565 = vpack.c.b16 %v511, %v510
      %v566 = vpack.c.b16 %v513, %v512
      %v567 = vpack.c.b16 %v515, %v514
      %v568 = vpack.c.b16 %v517, %v516
      %v569 = vpack.c.b16 %v519, %v518
      %v570 = vpack.c.b16 %v521, %v520
      %v571 = vpack.c.b16 %v523, %v522
      %v572 = vpack.c.b16 %v525, %v524
      %v573 = vpack.c.b16 %v527, %v526
      %v574 = vpack.c.b16 %v529, %v528
      %v575 = vpack.c.b16 %v531, %v530
      %v576 = vpack.c.b16 %v533, %v532
      %v577 = vpack.c.b16 %v535, %v534
      %v578 = vpack.c.b16 %v537, %v536
      %v579 = vpack.c.b16 %v539, %v538
      %v580 = vpack.c.b16 %v541, %v540
      %v581 = vpack.c.b16 %v543, %v542
      %v582 = vpack.c.b16 %v545, %v544
      %v583 = vpack.c.b16 %v547, %v546
      %v584 = vpack.c.b16 %v549, %v548
      %v585 = vpack.c.b16 %v551, %v550
      %v586 = vpack.c.b16 %v553, %v552
      %v587 = vpack.c.b16 %v555, %v554
      %620 = vmatpush.bf16.msra.mxu0 %v563
      %621 = vmatpush.bf16.msra.mxu0 %v562
      %622 = vmatpush.bf16.msra.mxu0 %v561
      %623 = vmatpush.bf16.msra.mxu0 %v560
      %624 = vmatpush.bf16.msra.mxu0 %v559
      %625 = vmatpush.bf16.msra.mxu0 %v558
      %626 = vmatpush.bf16.msra.mxu0 %v557
      %627 = vmatpush.bf16.msra.mxu0 %v556
      %628 = vmatmul.bf16.gmra.mxu0 %v356
      %v629 = vpop.f32.mrf.mxu0
      %v630 = vadd.f32 %v426, %v629
      %v631 = vpop.f32.mrf.mxu0
      %632 = vdwg.mxu0
      %633 = vmatpush.bf16.msra.mxu0 %v571
      %634 = vmatpush.bf16.msra.mxu0 %v570
      %635 = vmatpush.bf16.msra.mxu0 %v569
      %636 = vmatpush.bf16.msra.mxu0 %v568
      %637 = vmatpush.bf16.msra.mxu0 %v567
      %638 = vmatpush.bf16.msra.mxu0 %v566
      %639 = vmatpush.bf16.msra.mxu0 %v565
      %640 = vmatpush.bf16.msra.mxu0 %v564
      %641 = vmatmul.bf16.gmra.mxu0 %v357
      %v642 = vpop.f32.mrf.mxu0
      %v643 = vadd.f32 %v630, %v642
      %v644 = vpop.f32.mrf.mxu0
      %645 = vdwg.mxu0
      %646 = vmatpush.bf16.msra.mxu0 %v579
      %647 = vmatpush.bf16.msra.mxu0 %v578
      %648 = vmatpush.bf16.msra.mxu0 %v577
      %649 = vmatpush.bf16.msra.mxu0 %v576
      %650 = vmatpush.bf16.msra.mxu0 %v575
      %651 = vmatpush.bf16.msra.mxu0 %v574
      %652 = vmatpush.bf16.msra.mxu0 %v573
      %653 = vmatpush.bf16.msra.mxu0 %v572
      %654 = vmatmul.bf16.gmra.mxu0 %v358
      %v655 = vpop.f32.mrf.mxu0
      %v656 = vadd.f32 %v643, %v655
      %v657 = vpop.f32.mrf.mxu0
      %658 = vdwg.mxu0
      %659 = vmatpush.bf16.msra.mxu0 %v587
      %660 = vmatpush.bf16.msra.mxu0 %v586
      %661 = vmatpush.bf16.msra.mxu0 %v585
      %662 = vmatpush.bf16.msra.mxu0 %v584
      %663 = vmatpush.bf16.msra.mxu0 %v583
      %664 = vmatpush.bf16.msra.mxu0 %v582
      %665 = vmatpush.bf16.msra.mxu0 %v581
      %666 = vmatpush.bf16.msra.mxu0 %v580
      %667 = vmatmul.bf16.gmra.mxu0 %v359
      %v668 = vpop.f32.mrf.mxu0
      %v669 = vadd.f32 %v656, %v668
      %v670 = vpop.f32.mrf.mxu0
      %671 = vdwg.mxu0
      %v672 = vsub.f32 0.0, %v669
      %v673 = vmul.f32 %v672, 1.442695
      %v674 = vpow.pop %v673
      %v675 = vadd.f32 %v674, 1.0
      %v676 = vrcp.pop %v675
      %678 = vrot.lane.b32.xlu0 %v669, 124
      %v679 = vpop.permute.xlu0 %678
      %v681 = vmul.f32 %v676, %v679
      %v682 = vadd.f32 %v681, %v220
      %vm683 = vcmask 31744
      %v684 = vsel %vm683, %v682, 0.0
      %685 = vadd.xlane.f32.xlu0 %v684
      %v686 = vpop.xlane.xlu0 %685
      %v687 = vrcp.pop 4.0
      %v688 = vmul.f32 4.0, %v687
      %v689 = vsub.f32 1.0, %v688
      %v690 = vmul.f32 %v687, %v689
      %v691 = vadd.f32 %v687, %v690
      %vm692 = vweird.f32 %v687
      %v693 = vsel %vm692, %v687, %v691
      %v694 = vmul.f32 %v686, %v693
      %v695 = vsub.f32 %v682, %v694
      %v696 = vmul.f32 %v695, %v695
      %v697 = vsel %vm683, %v696, 0.0
      %698 = vadd.xlane.f32.xlu0 %v697
      %v699 = vpop.xlane.xlu0 %698
      %v700 = vmul.f32 %v699, %v693
      %v701 = vadd.f32 %v700, 1e-05
      %v702 = vrsqrt.pop %v701
      %v703 = vmul.f32 %v702, %v701
      %v704 = vmul.f32 %v703, %v702
      %v705 = vmul.f32 0.5, %v704
      %v706 = vsub.f32 1.5, %v705
      %v707 = vmul.f32 %v702, %v706
      %vm708 = vweird.f32 %v701
      %vm709 = vweird.f32 %v702
      %vm710 = vmor %vm708, %vm709
      %v711 = vsel %vm710, %v702, %v707
      %v712 = vmul.f32 %v695, %v711
      %713 = vst.msk [vmem:[%s219] sm:$0xff] %vm683, %v712
      %p714 = scmp.lt.s32.totalorder %s16, 2
      %s715 = scalar_select %p714, %s16, 2
      %s716 = smul.addr %s715, 8
      %s717 = scalar_lea.vmem %s5, %s716
      // Predicated region
      $region41: #{grn_metafeature.1} parent=39 // pred_check
        %p718 = pneg %p144
      $region42: #{grn_metafeature.1} parent=39 // pred_check_branch
        %720 = sbr.rel (%p718) target = $region44
      $region43: #{grn_metafeature.1} parent=39 // pred_region
        _
      $region44: #{grn_metafeature.1} parent=39 // pred_fallthru
        _
    $region40: #{grn_metafeature.1} parent=5 // pred_fallthru
      _
    %p721 = scmp.le.s32.totalorder 2, %s11
    // Predicated region
    $region45: #{grn_metafeature.1} parent=5 // pred_check
      %p722 = pneg %p721
    $region46: #{grn_metafeature.1} parent=5 // pred_check_branch
      %724 = sbr.rel (%p722) target = $region48
    $region47: #{grn_metafeature.1} parent=5 // pred_region
      %s725 = ssub.s32 %s11, 2
      // Predicated region
      $region49: #{grn_metafeature.1} parent=47 // pred_check
        %p726 = pneg %p150
      $region50: #{grn_metafeature.1} parent=47 // pred_check_branch
        %728 = sbr.rel (%p726) target = $region52
      $region51: #{grn_metafeature.1} parent=47 // pred_region
        %p729 = scmp.lt.s32.totalorder %s17, 2
        %s730 = scalar_select %p729, %s17, 2
        %s731 = smul.addr %s730, 8
        %s732 = scalar_lea.vmem %s5, %s731
      $region52: #{grn_metafeature.1} parent=47 // pred_fallthru
        _
    $region48: #{grn_metafeature.1} parent=5 // pred_fallthru
      _
  $region6: #{grn_metafeature.1} parent=0 // loop_footer
    %s15 = sadd.s32 1, %s11
  $region7: #{grn_metafeature.1} parent=0 // loop_footer_branch
    %10 = sbr.rel target = $region3
  $region8: #{grn_metafeature.1} parent=0 // loop_exit
    _

</llo_original>
